<compile_context>
chip_gen: v5e
topology: v5e:2x2
jax: 0.10.0
libtpu: 0.0.40
codegen_flags: <defaults>
</compile_context>

<pallas_src>
import jax
import jax.numpy as jnp
import numpy as np
from jax.experimental import pallas as pl
from jax.experimental.pallas import tpu as pltpu


# ----------------------------------------------------------------------------
# Pallas kernel: lane/sublane-dense pointwise (1x1) conv as VPU FMAs
# ----------------------------------------------------------------------------
def _pointwise_conv_kernel(w_ref, b_ref, x_ref, o_ref):
    # w_ref: (C_in*C_out,)        f32 SMEM, w_ref[ci*C_out + co] = W[ci, co]
    # b_ref: (C_out,)             f32 SMEM
    # x_ref: (1, C_in,  S, 128)   f32 VMEM  (S rows of 128 lanes, full vregs)
    # o_ref: (1, C_out, S, 128)   f32 VMEM
    c_in = x_ref.shape[1]
    c_out = o_ref.shape[1]

    for co in range(c_out):  # fully unrolled: C_in*C_out scalar*vector FMAs (VPU)
        acc = x_ref[0, 0] * w_ref[co] + b_ref[co]       # (S, 128), bias fused
        for ci in range(1, c_in):
            acc = acc + x_ref[0, ci] * w_ref[ci * c_out + co]
        # Store each channel as soon as it is ready: short live ranges, no
        # concatenate, dense (S, 128) store.
        o_ref[0, co] = acc.astype(o_ref.dtype)


# ----------------------------------------------------------------------------
# Tiling helpers
# ----------------------------------------------------------------------------
def _padded_hw(hw: int) -> int:
    """Pad H*W so the lane axis is 128-wide and, for large images, the sublane
    row count (hw/128) is a multiple of 8 -> always tileable, never forced into
    a full-extent (VMEM-busting) block on huge non-128-multiple images."""
    unit = 1024 if hw > 8192 else 128  # 1024 = 8 sublanes * 128 lanes
    return ((hw + unit - 1) // unit) * unit


def _pick_spatial_rows(s_total: int, n: int, c_in: int, c_out: int) -> int:
    """Tile height (rows of 128 lanes) per grid step.

    Goals: legal (multiple of 8, or the full extent); MB-class HBM traffic per
    step so the ~0.35us per-step overhead is amortized; double-buffered in+out
    well under the scoped VMEM limit (v7x: 64 MiB physical); and at least 4
    grid steps when possible so both v7x TensorCores stay fed.
    """
    vmem_budget = 12 * 1024 * 1024                  # double-buffered in + out
    bytes_per_row = 2 * (c_in + c_out) * 128 * 4
    cap = max(8, min(1024, (vmem_budget // bytes_per_row) // 8 * 8))

    candidates = [d for d in range(8, s_total + 1, 8) if s_total % d == 0]
    if s_total not in candidates:
        candidates.append(s_total)                   # full extent is always legal

    under_cap = [d for d in candidates if d <= cap]
    if not under_cap:
        return min(candidates)
    feeds_both_cores = [d for d in under_cap if n * (s_total // d) >= 4]
    return max(feeds_both_cores) if feeds_both_cores else max(under_cap)


def pointwise_conv_nchw(x4: jax.Array, w_flat: jax.Array, b: jax.Array) -> jax.Array:
    """x4: (N, C_in, S, 128), w_flat: (C_in*C_out,), b: (C_out,) -> (N, C_out, S, 128)."""
    n, c_in, s_total, lanes = x4.shape
    c_out = b.shape[0]
    s_tile = _pick_spatial_rows(s_total, n, c_in, c_out)
    grid = (n, s_total // s_tile)

    return pl.pallas_call(
        _pointwise_conv_kernel,
        out_shape=jax.ShapeDtypeStruct((n, c_out, s_total, lanes), x4.dtype),
        grid_spec=pltpu.PrefetchScalarGridSpec(
            num_scalar_prefetch=0,
            grid=grid,
            in_specs=[
                # Untiled full-array SMEM blocks: copied once (constant block),
                # read as scalars inside the kernel.
                pl.BlockSpec(memory_space=pltpu.MemorySpace.SMEM),  # weights
                pl.BlockSpec(memory_space=pltpu.MemorySpace.SMEM),  # bias
                pl.BlockSpec((1, c_in, s_tile, lanes), lambda i, j: (i, 0, j, 0)),
            ],
            out_specs=pl.BlockSpec((1, c_out, s_tile, lanes), lambda i, j: (i, 0, j, 0)),
        ),
        compiler_params=pltpu.CompilerParams(
            dimension_semantics=("parallel", "parallel"),
            vmem_limit_bytes=32 * 1024 * 1024,
        ),
    )(w_flat, b, x4)


@jax.jit
def _forward_impl(x: jax.Array, w_flat: jax.Array, b: jax.Array) -> jax.Array:
    # NCHW in, NCHW out.  Reshape/pad to the lane-dense (N, C, HW/128, 128)
    # layout; the row-major reshapes are free, padding only for ragged HW.
    n, c_in, h, w = x.shape
    c_out = b.shape[0]
    hw = h * w
    x = x.astype(jnp.float32)
    hw_pad = _padded_hw(hw)
    x3 = x.reshape(n, c_in, hw)
    if hw_pad != hw:
        x3 = jnp.pad(x3, ((0, 0), (0, 0), (0, hw_pad - hw)))
    x4 = x3.reshape(n, c_in, hw_pad // 128, 128)
    y4 = pointwise_conv_nchw(x4, w_flat, b)
    y3 = y4.reshape(n, c_out, hw_pad)[:, :, :hw]
    return y3.reshape(n, c_out, h, w)


# ----------------------------------------------------------------------------
# GPUWrapper equivalent
# ----------------------------------------------------------------------------
class GPUWrapperPallas:
    """Mirrors GPUWrapper.forward: host -> accelerator -> module -> host.

    The wrapped "module" is a deterministic 1x1 Conv2d(4 -> 8) whose compute
    runs in the Pallas kernel above.
    """

    def __init__(self, c_in: int = 4, c_out: int = 8):
        # Deterministic parameter init (synthetic, not a checkpoint load).
        # PyTorch Conv2d weight: (C_out, C_in, 1, 1); bias: (C_out,)
        w4d = (
            jnp.arange(c_out * c_in, dtype=jnp.float32).reshape(c_out, c_in, 1, 1)
            / (c_out * c_in)
            - 0.5
        )
        self.w_ci_co = jnp.transpose(w4d[:, :, 0, 0], (1, 0))  # (C_in, C_out)
        bias = jnp.linspace(-0.1, 0.1, c_out, dtype=jnp.float32)
        self.c_in = c_in
        self.c_out = c_out
        # `.cuda()` in GPUWrapper.__init__ == park params on the accelerator.
        dev = jax.devices()[0]
        self.w_flat = jax.device_put(self.w_ci_co.reshape(-1), dev)  # (C_in*C_out,)
        self.bias = jax.device_put(bias, dev)

    def forward(self, data_host: np.ndarray) -> np.ndarray:
        # data = data.cuda() -> one host->device transfer in the input's native
        # dtype (cast to f32 on-device; halves PCIe bytes for 16-bit hosts).
        dev = jax.devices()[0]
        x = jax.device_put(np.asarray(data_host), dev)
        assert x.shape[1] == self.c_in

        # ret = self.module(data) -> jitted (pad/reshape -> Pallas kernel -> reshape).
        y = _forward_impl(x, self.w_flat, self.bias)

        # ret = ret.cpu() -> device_get already synchronizes; no extra block here.
        return np.asarray(jax.device_get(y))

    __call__ = forward


if __name__ == "__main__":
    key = jax.random.PRNGKey(0)
    N, C, H, W = 2, 4, 16, 16
    x = np.asarray(jax.random.normal(key, (N, C, H, W), dtype=jnp.float32))

    wrapper = GPUWrapperPallas(c_in=C, c_out=8)
    out = wrapper(x)  # numpy array on host, mirroring ret.cpu()
    jax.block_until_ready(jnp.asarray(out))

    # Cross-check against a plain-numpy reference of the wrapped 1x1 conv.
    W_ci_co = np.asarray(wrapper.w_ci_co)  # (C_in, C_out)
    b_np = np.asarray(wrapper.bias)
    ref = np.einsum("io,nihw->nohw", W_ci_co, x) + b_np[None, :, None, None]
    np.testing.assert_allclose(out, ref, rtol=1e-5, atol=1e-5)

    assert out.shape == (N, 8, H, W)
    print("KERNEL_OK")
</pallas_src>

<mosaic_0001>
module attributes {stable_mosaic.version = 11 : i64} {
  func.func @_pointwise_conv_kernel(%arg0: i32, %arg1: i32, %arg2: memref<32xf32, #tpu.memory_space<smem>>, %arg3: memref<8xf32, #tpu.memory_space<smem>>, %arg4: memref<1x4x2x128xf32, #tpu.memory_space<vmem>>, %arg5: memref<1x8x2x128xf32, #tpu.memory_space<vmem>>) attributes {dimension_semantics = [#tpu.dimension_semantics<parallel>, #tpu.dimension_semantics<parallel>], iteration_bounds = array<i64: 2, 1>, scalar_prefetch = 0 : i64, scratch_operands = 0 : i64, tpu.core_type = #tpu.core_type<tc>, window_params = [{transform_indices = @transform_0, window_bounds = array<i64: 32>}, {transform_indices = @transform_1, window_bounds = array<i64: 8>}, {transform_indices = @transform_2, window_bounds = array<i64: 1, 4, 2, 128>}, {transform_indices = @transform_3, window_bounds = array<i64: 1, 8, 2, 128>}]} {
    %c0 = arith.constant 0 : index
    %c0_0 = arith.constant 0 : index
    %c0_1 = arith.constant 0 : index
    %c0_2 = arith.constant 0 : index
    %0 = vector.load %arg4[%c0, %c0_0, %c0_1, %c0_2] : memref<1x4x2x128xf32, #tpu.memory_space<vmem>>, vector<1x1x2x128xf32>
    %1 = vector.shape_cast %0 : vector<1x1x2x128xf32> to vector<2x128xf32>
    %c0_3 = arith.constant 0 : index
    %2 = memref.load %arg2[%c0_3] : memref<32xf32, #tpu.memory_space<smem>>
    %3 = vector.broadcast %2 : f32 to vector<2x128xf32>
    %4 = arith.mulf %1, %3 : vector<2x128xf32>
    %c0_4 = arith.constant 0 : index
    %5 = memref.load %arg3[%c0_4] : memref<8xf32, #tpu.memory_space<smem>>
    %6 = vector.broadcast %5 : f32 to vector<2x128xf32>
    %7 = arith.addf %4, %6 : vector<2x128xf32>
    %c0_5 = arith.constant 0 : index
    %c1 = arith.constant 1 : index
    %c0_6 = arith.constant 0 : index
    %c0_7 = arith.constant 0 : index
    %8 = vector.load %arg4[%c0_5, %c1, %c0_6, %c0_7] : memref<1x4x2x128xf32, #tpu.memory_space<vmem>>, vector<1x1x2x128xf32>
    %9 = vector.shape_cast %8 : vector<1x1x2x128xf32> to vector<2x128xf32>
    %c8 = arith.constant 8 : index
    %10 = memref.load %arg2[%c8] : memref<32xf32, #tpu.memory_space<smem>>
    %11 = vector.broadcast %10 : f32 to vector<2x128xf32>
    %12 = arith.mulf %9, %11 : vector<2x128xf32>
    %13 = arith.addf %7, %12 : vector<2x128xf32>
    %c0_8 = arith.constant 0 : index
    %c2 = arith.constant 2 : index
    %c0_9 = arith.constant 0 : index
    %c0_10 = arith.constant 0 : index
    %14 = vector.load %arg4[%c0_8, %c2, %c0_9, %c0_10] : memref<1x4x2x128xf32, #tpu.memory_space<vmem>>, vector<1x1x2x128xf32>
    %15 = vector.shape_cast %14 : vector<1x1x2x128xf32> to vector<2x128xf32>
    %c16 = arith.constant 16 : index
    %16 = memref.load %arg2[%c16] : memref<32xf32, #tpu.memory_space<smem>>
    %17 = vector.broadcast %16 : f32 to vector<2x128xf32>
    %18 = arith.mulf %15, %17 : vector<2x128xf32>
    %19 = arith.addf %13, %18 : vector<2x128xf32>
    %c0_11 = arith.constant 0 : index
    %c3 = arith.constant 3 : index
    %c0_12 = arith.constant 0 : index
    %c0_13 = arith.constant 0 : index
    %20 = vector.load %arg4[%c0_11, %c3, %c0_12, %c0_13] : memref<1x4x2x128xf32, #tpu.memory_space<vmem>>, vector<1x1x2x128xf32>
    %21 = vector.shape_cast %20 : vector<1x1x2x128xf32> to vector<2x128xf32>
    %c24 = arith.constant 24 : index
    %22 = memref.load %arg2[%c24] : memref<32xf32, #tpu.memory_space<smem>>
    %23 = vector.broadcast %22 : f32 to vector<2x128xf32>
    %24 = arith.mulf %21, %23 : vector<2x128xf32>
    %25 = arith.addf %19, %24 : vector<2x128xf32>
    %c0_14 = arith.constant 0 : index
    %c0_15 = arith.constant 0 : index
    %c0_16 = arith.constant 0 : index
    %c0_17 = arith.constant 0 : index
    %26 = vector.load %arg5[%c0_14, %c0_15, %c0_16, %c0_17] : memref<1x8x2x128xf32, #tpu.memory_space<vmem>>, vector<1x1x2x128xf32>
    %27 = vector.shape_cast %26 : vector<1x1x2x128xf32> to vector<2x128xf32>
    %28 = vector.shape_cast %25 : vector<2x128xf32> to vector<1x1x2x128xf32>
    tpu.vector_store %arg5[%c0_14, %c0_15, %c0_16, %c0_17], %28 {strides = array<i32>} : memref<1x8x2x128xf32, #tpu.memory_space<vmem>>, vector<1x1x2x128xf32>,
    %c0_18 = arith.constant 0 : index
    %c0_19 = arith.constant 0 : index
    %c0_20 = arith.constant 0 : index
    %c0_21 = arith.constant 0 : index
    %29 = vector.load %arg4[%c0_18, %c0_19, %c0_20, %c0_21] : memref<1x4x2x128xf32, #tpu.memory_space<vmem>>, vector<1x1x2x128xf32>
    %30 = vector.shape_cast %29 : vector<1x1x2x128xf32> to vector<2x128xf32>
    %c1_22 = arith.constant 1 : index
    %31 = memref.load %arg2[%c1_22] : memref<32xf32, #tpu.memory_space<smem>>
    %32 = vector.broadcast %31 : f32 to vector<2x128xf32>
    %33 = arith.mulf %30, %32 : vector<2x128xf32>
    %c1_23 = arith.constant 1 : index
    %34 = memref.load %arg3[%c1_23] : memref<8xf32, #tpu.memory_space<smem>>
    %35 = vector.broadcast %34 : f32 to vector<2x128xf32>
    %36 = arith.addf %33, %35 : vector<2x128xf32>
    %c0_24 = arith.constant 0 : index
    %c1_25 = arith.constant 1 : index
    %c0_26 = arith.constant 0 : index
    %c0_27 = arith.constant 0 : index
    %37 = vector.load %arg4[%c0_24, %c1_25, %c0_26, %c0_27] : memref<1x4x2x128xf32, #tpu.memory_space<vmem>>, vector<1x1x2x128xf32>
    %38 = vector.shape_cast %37 : vector<1x1x2x128xf32> to vector<2x128xf32>
    %c9 = arith.constant 9 : index
    %39 = memref.load %arg2[%c9] : memref<32xf32, #tpu.memory_space<smem>>
    %40 = vector.broadcast %39 : f32 to vector<2x128xf32>
    %41 = arith.mulf %38, %40 : vector<2x128xf32>
    %42 = arith.addf %36, %41 : vector<2x128xf32>
    %c0_28 = arith.constant 0 : index
    %c2_29 = arith.constant 2 : index
    %c0_30 = arith.constant 0 : index
    %c0_31 = arith.constant 0 : index
    %43 = vector.load %arg4[%c0_28, %c2_29, %c0_30, %c0_31] : memref<1x4x2x128xf32, #tpu.memory_space<vmem>>, vector<1x1x2x128xf32>
    %44 = vector.shape_cast %43 : vector<1x1x2x128xf32> to vector<2x128xf32>
    %c17 = arith.constant 17 : index
    %45 = memref.load %arg2[%c17] : memref<32xf32, #tpu.memory_space<smem>>
    %46 = vector.broadcast %45 : f32 to vector<2x128xf32>
    %47 = arith.mulf %44, %46 : vector<2x128xf32>
    %48 = arith.addf %42, %47 : vector<2x128xf32>
    %c0_32 = arith.constant 0 : index
    %c3_33 = arith.constant 3 : index
    %c0_34 = arith.constant 0 : index
    %c0_35 = arith.constant 0 : index
    %49 = vector.load %arg4[%c0_32, %c3_33, %c0_34, %c0_35] : memref<1x4x2x128xf32, #tpu.memory_space<vmem>>, vector<1x1x2x128xf32>
    %50 = vector.shape_cast %49 : vector<1x1x2x128xf32> to vector<2x128xf32>
    %c25 = arith.constant 25 : index
    %51 = memref.load %arg2[%c25] : memref<32xf32, #tpu.memory_space<smem>>
    %52 = vector.broadcast %51 : f32 to vector<2x128xf32>
    %53 = arith.mulf %50, %52 : vector<2x128xf32>
    %54 = arith.addf %48, %53 : vector<2x128xf32>
    %c0_36 = arith.constant 0 : index
    %c1_37 = arith.constant 1 : index
    %c0_38 = arith.constant 0 : index
    %c0_39 = arith.constant 0 : index
    %55 = vector.load %arg5[%c0_36, %c1_37, %c0_38, %c0_39] : memref<1x8x2x128xf32, #tpu.memory_space<vmem>>, vector<1x1x2x128xf32>
    %56 = vector.shape_cast %55 : vector<1x1x2x128xf32> to vector<2x128xf32>
    %57 = vector.shape_cast %54 : vector<2x128xf32> to vector<1x1x2x128xf32>
    tpu.vector_store %arg5[%c0_36, %c1_37, %c0_38, %c0_39], %57 {strides = array<i32>} : memref<1x8x2x128xf32, #tpu.memory_space<vmem>>, vector<1x1x2x128xf32>,
    %c0_40 = arith.constant 0 : index
    %c0_41 = arith.constant 0 : index
    %c0_42 = arith.constant 0 : index
    %c0_43 = arith.constant 0 : index
    %58 = vector.load %arg4[%c0_40, %c0_41, %c0_42, %c0_43] : memref<1x4x2x128xf32, #tpu.memory_space<vmem>>, vector<1x1x2x128xf32>
    %59 = vector.shape_cast %58 : vector<1x1x2x128xf32> to vector<2x128xf32>
    %c2_44 = arith.constant 2 : index
    %60 = memref.load %arg2[%c2_44] : memref<32xf32, #tpu.memory_space<smem>>
    %61 = vector.broadcast %60 : f32 to vector<2x128xf32>
    %62 = arith.mulf %59, %61 : vector<2x128xf32>
    %c2_45 = arith.constant 2 : index
    %63 = memref.load %arg3[%c2_45] : memref<8xf32, #tpu.memory_space<smem>>
    %64 = vector.broadcast %63 : f32 to vector<2x128xf32>
    %65 = arith.addf %62, %64 : vector<2x128xf32>
    %c0_46 = arith.constant 0 : index
    %c1_47 = arith.constant 1 : index
    %c0_48 = arith.constant 0 : index
    %c0_49 = arith.constant 0 : index
    %66 = vector.load %arg4[%c0_46, %c1_47, %c0_48, %c0_49] : memref<1x4x2x128xf32, #tpu.memory_space<vmem>>, vector<1x1x2x128xf32>
    %67 = vector.shape_cast %66 : vector<1x1x2x128xf32> to vector<2x128xf32>
    %c10 = arith.constant 10 : index
    %68 = memref.load %arg2[%c10] : memref<32xf32, #tpu.memory_space<smem>>
    %69 = vector.broadcast %68 : f32 to vector<2x128xf32>
    %70 = arith.mulf %67, %69 : vector<2x128xf32>
    %71 = arith.addf %65, %70 : vector<2x128xf32>
    %c0_50 = arith.constant 0 : index
    %c2_51 = arith.constant 2 : index
    %c0_52 = arith.constant 0 : index
    %c0_53 = arith.constant 0 : index
    %72 = vector.load %arg4[%c0_50, %c2_51, %c0_52, %c0_53] : memref<1x4x2x128xf32, #tpu.memory_space<vmem>>, vector<1x1x2x128xf32>
    %73 = vector.shape_cast %72 : vector<1x1x2x128xf32> to vector<2x128xf32>
    %c18 = arith.constant 18 : index
    %74 = memref.load %arg2[%c18] : memref<32xf32, #tpu.memory_space<smem>>
    %75 = vector.broadcast %74 : f32 to vector<2x128xf32>
    %76 = arith.mulf %73, %75 : vector<2x128xf32>
    %77 = arith.addf %71, %76 : vector<2x128xf32>
    %c0_54 = arith.constant 0 : index
    %c3_55 = arith.constant 3 : index
    %c0_56 = arith.constant 0 : index
    %c0_57 = arith.constant 0 : index
    %78 = vector.load %arg4[%c0_54, %c3_55, %c0_56, %c0_57] : memref<1x4x2x128xf32, #tpu.memory_space<vmem>>, vector<1x1x2x128xf32>
    %79 = vector.shape_cast %78 : vector<1x1x2x128xf32> to vector<2x128xf32>
    %c26 = arith.constant 26 : index
    %80 = memref.load %arg2[%c26] : memref<32xf32, #tpu.memory_space<smem>>
    %81 = vector.broadcast %80 : f32 to vector<2x128xf32>
    %82 = arith.mulf %79, %81 : vector<2x128xf32>
    %83 = arith.addf %77, %82 : vector<2x128xf32>
    %c0_58 = arith.constant 0 : index
    %c2_59 = arith.constant 2 : index
    %c0_60 = arith.constant 0 : index
    %c0_61 = arith.constant 0 : index
    %84 = vector.load %arg5[%c0_58, %c2_59, %c0_60, %c0_61] : memref<1x8x2x128xf32, #tpu.memory_space<vmem>>, vector<1x1x2x128xf32>
    %85 = vector.shape_cast %84 : vector<1x1x2x128xf32> to vector<2x128xf32>
    %86 = vector.shape_cast %83 : vector<2x128xf32> to vector<1x1x2x128xf32>
    tpu.vector_store %arg5[%c0_58, %c2_59, %c0_60, %c0_61], %86 {strides = array<i32>} : memref<1x8x2x128xf32, #tpu.memory_space<vmem>>, vector<1x1x2x128xf32>,
    %c0_62 = arith.constant 0 : index
    %c0_63 = arith.constant 0 : index
    %c0_64 = arith.constant 0 : index
    %c0_65 = arith.constant 0 : index
    %87 = vector.load %arg4[%c0_62, %c0_63, %c0_64, %c0_65] : memref<1x4x2x128xf32, #tpu.memory_space<vmem>>, vector<1x1x2x128xf32>
    %88 = vector.shape_cast %87 : vector<1x1x2x128xf32> to vector<2x128xf32>
    %c3_66 = arith.constant 3 : index
    %89 = memref.load %arg2[%c3_66] : memref<32xf32, #tpu.memory_space<smem>>
    %90 = vector.broadcast %89 : f32 to vector<2x128xf32>
    %91 = arith.mulf %88, %90 : vector<2x128xf32>
    %c3_67 = arith.constant 3 : index
    %92 = memref.load %arg3[%c3_67] : memref<8xf32, #tpu.memory_space<smem>>
    %93 = vector.broadcast %92 : f32 to vector<2x128xf32>
    %94 = arith.addf %91, %93 : vector<2x128xf32>
    %c0_68 = arith.constant 0 : index
    %c1_69 = arith.constant 1 : index
    %c0_70 = arith.constant 0 : index
    %c0_71 = arith.constant 0 : index
    %95 = vector.load %arg4[%c0_68, %c1_69, %c0_70, %c0_71] : memref<1x4x2x128xf32, #tpu.memory_space<vmem>>, vector<1x1x2x128xf32>
    %96 = vector.shape_cast %95 : vector<1x1x2x128xf32> to vector<2x128xf32>
    %c11 = arith.constant 11 : index
    %97 = memref.load %arg2[%c11] : memref<32xf32, #tpu.memory_space<smem>>
    %98 = vector.broadcast %97 : f32 to vector<2x128xf32>
    %99 = arith.mulf %96, %98 : vector<2x128xf32>
    %100 = arith.addf %94, %99 : vector<2x128xf32>
    %c0_72 = arith.constant 0 : index
    %c2_73 = arith.constant 2 : index
    %c0_74 = arith.constant 0 : index
    %c0_75 = arith.constant 0 : index
    %101 = vector.load %arg4[%c0_72, %c2_73, %c0_74, %c0_75] : memref<1x4x2x128xf32, #tpu.memory_space<vmem>>, vector<1x1x2x128xf32>
    %102 = vector.shape_cast %101 : vector<1x1x2x128xf32> to vector<2x128xf32>
    %c19 = arith.constant 19 : index
    %103 = memref.load %arg2[%c19] : memref<32xf32, #tpu.memory_space<smem>>
    %104 = vector.broadcast %103 : f32 to vector<2x128xf32>
    %105 = arith.mulf %102, %104 : vector<2x128xf32>
    %106 = arith.addf %100, %105 : vector<2x128xf32>
    %c0_76 = arith.constant 0 : index
    %c3_77 = arith.constant 3 : index
    %c0_78 = arith.constant 0 : index
    %c0_79 = arith.constant 0 : index
    %107 = vector.load %arg4[%c0_76, %c3_77, %c0_78, %c0_79] : memref<1x4x2x128xf32, #tpu.memory_space<vmem>>, vector<1x1x2x128xf32>
    %108 = vector.shape_cast %107 : vector<1x1x2x128xf32> to vector<2x128xf32>
    %c27 = arith.constant 27 : index
    %109 = memref.load %arg2[%c27] : memref<32xf32, #tpu.memory_space<smem>>
    %110 = vector.broadcast %109 : f32 to vector<2x128xf32>
    %111 = arith.mulf %108, %110 : vector<2x128xf32>
    %112 = arith.addf %106, %111 : vector<2x128xf32>
    %c0_80 = arith.constant 0 : index
    %c3_81 = arith.constant 3 : index
    %c0_82 = arith.constant 0 : index
    %c0_83 = arith.constant 0 : index
    %113 = vector.load %arg5[%c0_80, %c3_81, %c0_82, %c0_83] : memref<1x8x2x128xf32, #tpu.memory_space<vmem>>, vector<1x1x2x128xf32>
    %114 = vector.shape_cast %113 : vector<1x1x2x128xf32> to vector<2x128xf32>
    %115 = vector.shape_cast %112 : vector<2x128xf32> to vector<1x1x2x128xf32>
    tpu.vector_store %arg5[%c0_80, %c3_81, %c0_82, %c0_83], %115 {strides = array<i32>} : memref<1x8x2x128xf32, #tpu.memory_space<vmem>>, vector<1x1x2x128xf32>,
    %c0_84 = arith.constant 0 : index
    %c0_85 = arith.constant 0 : index
    %c0_86 = arith.constant 0 : index
    %c0_87 = arith.constant 0 : index
    %116 = vector.load %arg4[%c0_84, %c0_85, %c0_86, %c0_87] : memref<1x4x2x128xf32, #tpu.memory_space<vmem>>, vector<1x1x2x128xf32>
    %117 = vector.shape_cast %116 : vector<1x1x2x128xf32> to vector<2x128xf32>
    %c4 = arith.constant 4 : index
    %118 = memref.load %arg2[%c4] : memref<32xf32, #tpu.memory_space<smem>>
    %119 = vector.broadcast %118 : f32 to vector<2x128xf32>
    %120 = arith.mulf %117, %119 : vector<2x128xf32>
    %c4_88 = arith.constant 4 : index
    %121 = memref.load %arg3[%c4_88] : memref<8xf32, #tpu.memory_space<smem>>
    %122 = vector.broadcast %121 : f32 to vector<2x128xf32>
    %123 = arith.addf %120, %122 : vector<2x128xf32>
    %c0_89 = arith.constant 0 : index
    %c1_90 = arith.constant 1 : index
    %c0_91 = arith.constant 0 : index
    %c0_92 = arith.constant 0 : index
    %124 = vector.load %arg4[%c0_89, %c1_90, %c0_91, %c0_92] : memref<1x4x2x128xf32, #tpu.memory_space<vmem>>, vector<1x1x2x128xf32>
    %125 = vector.shape_cast %124 : vector<1x1x2x128xf32> to vector<2x128xf32>
    %c12 = arith.constant 12 : index
    %126 = memref.load %arg2[%c12] : memref<32xf32, #tpu.memory_space<smem>>
    %127 = vector.broadcast %126 : f32 to vector<2x128xf32>
    %128 = arith.mulf %125, %127 : vector<2x128xf32>
    %129 = arith.addf %123, %128 : vector<2x128xf32>
    %c0_93 = arith.constant 0 : index
    %c2_94 = arith.constant 2 : index
    %c0_95 = arith.constant 0 : index
    %c0_96 = arith.constant 0 : index
    %130 = vector.load %arg4[%c0_93, %c2_94, %c0_95, %c0_96] : memref<1x4x2x128xf32, #tpu.memory_space<vmem>>, vector<1x1x2x128xf32>
    %131 = vector.shape_cast %130 : vector<1x1x2x128xf32> to vector<2x128xf32>
    %c20 = arith.constant 20 : index
    %132 = memref.load %arg2[%c20] : memref<32xf32, #tpu.memory_space<smem>>
    %133 = vector.broadcast %132 : f32 to vector<2x128xf32>
    %134 = arith.mulf %131, %133 : vector<2x128xf32>
    %135 = arith.addf %129, %134 : vector<2x128xf32>
    %c0_97 = arith.constant 0 : index
    %c3_98 = arith.constant 3 : index
    %c0_99 = arith.constant 0 : index
    %c0_100 = arith.constant 0 : index
    %136 = vector.load %arg4[%c0_97, %c3_98, %c0_99, %c0_100] : memref<1x4x2x128xf32, #tpu.memory_space<vmem>>, vector<1x1x2x128xf32>
    %137 = vector.shape_cast %136 : vector<1x1x2x128xf32> to vector<2x128xf32>
    %c28 = arith.constant 28 : index
    %138 = memref.load %arg2[%c28] : memref<32xf32, #tpu.memory_space<smem>>
    %139 = vector.broadcast %138 : f32 to vector<2x128xf32>
    %140 = arith.mulf %137, %139 : vector<2x128xf32>
    %141 = arith.addf %135, %140 : vector<2x128xf32>
    %c0_101 = arith.constant 0 : index
    %c4_102 = arith.constant 4 : index
    %c0_103 = arith.constant 0 : index
    %c0_104 = arith.constant 0 : index
    %142 = vector.load %arg5[%c0_101, %c4_102, %c0_103, %c0_104] : memref<1x8x2x128xf32, #tpu.memory_space<vmem>>, vector<1x1x2x128xf32>
    %143 = vector.shape_cast %142 : vector<1x1x2x128xf32> to vector<2x128xf32>
    %144 = vector.shape_cast %141 : vector<2x128xf32> to vector<1x1x2x128xf32>
    tpu.vector_store %arg5[%c0_101, %c4_102, %c0_103, %c0_104], %144 {strides = array<i32>} : memref<1x8x2x128xf32, #tpu.memory_space<vmem>>, vector<1x1x2x128xf32>,
    %c0_105 = arith.constant 0 : index
    %c0_106 = arith.constant 0 : index
    %c0_107 = arith.constant 0 : index
    %c0_108 = arith.constant 0 : index
    %145 = vector.load %arg4[%c0_105, %c0_106, %c0_107, %c0_108] : memref<1x4x2x128xf32, #tpu.memory_space<vmem>>, vector<1x1x2x128xf32>
    %146 = vector.shape_cast %145 : vector<1x1x2x128xf32> to vector<2x128xf32>
    %c5 = arith.constant 5 : index
    %147 = memref.load %arg2[%c5] : memref<32xf32, #tpu.memory_space<smem>>
    %148 = vector.broadcast %147 : f32 to vector<2x128xf32>
    %149 = arith.mulf %146, %148 : vector<2x128xf32>
    %c5_109 = arith.constant 5 : index
    %150 = memref.load %arg3[%c5_109] : memref<8xf32, #tpu.memory_space<smem>>
    %151 = vector.broadcast %150 : f32 to vector<2x128xf32>
    %152 = arith.addf %149, %151 : vector<2x128xf32>
    %c0_110 = arith.constant 0 : index
    %c1_111 = arith.constant 1 : index
    %c0_112 = arith.constant 0 : index
    %c0_113 = arith.constant 0 : index
    %153 = vector.load %arg4[%c0_110, %c1_111, %c0_112, %c0_113] : memref<1x4x2x128xf32, #tpu.memory_space<vmem>>, vector<1x1x2x128xf32>
    %154 = vector.shape_cast %153 : vector<1x1x2x128xf32> to vector<2x128xf32>
    %c13 = arith.constant 13 : index
    %155 = memref.load %arg2[%c13] : memref<32xf32, #tpu.memory_space<smem>>
    %156 = vector.broadcast %155 : f32 to vector<2x128xf32>
    %157 = arith.mulf %154, %156 : vector<2x128xf32>
    %158 = arith.addf %152, %157 : vector<2x128xf32>
    %c0_114 = arith.constant 0 : index
    %c2_115 = arith.constant 2 : index
    %c0_116 = arith.constant 0 : index
    %c0_117 = arith.constant 0 : index
    %159 = vector.load %arg4[%c0_114, %c2_115, %c0_116, %c0_117] : memref<1x4x2x128xf32, #tpu.memory_space<vmem>>, vector<1x1x2x128xf32>
    %160 = vector.shape_cast %159 : vector<1x1x2x128xf32> to vector<2x128xf32>
    %c21 = arith.constant 21 : index
    %161 = memref.load %arg2[%c21] : memref<32xf32, #tpu.memory_space<smem>>
    %162 = vector.broadcast %161 : f32 to vector<2x128xf32>
    %163 = arith.mulf %160, %162 : vector<2x128xf32>
    %164 = arith.addf %158, %163 : vector<2x128xf32>
    %c0_118 = arith.constant 0 : index
    %c3_119 = arith.constant 3 : index
    %c0_120 = arith.constant 0 : index
    %c0_121 = arith.constant 0 : index
    %165 = vector.load %arg4[%c0_118, %c3_119, %c0_120, %c0_121] : memref<1x4x2x128xf32, #tpu.memory_space<vmem>>, vector<1x1x2x128xf32>
    %166 = vector.shape_cast %165 : vector<1x1x2x128xf32> to vector<2x128xf32>
    %c29 = arith.constant 29 : index
    %167 = memref.load %arg2[%c29] : memref<32xf32, #tpu.memory_space<smem>>
    %168 = vector.broadcast %167 : f32 to vector<2x128xf32>
    %169 = arith.mulf %166, %168 : vector<2x128xf32>
    %170 = arith.addf %164, %169 : vector<2x128xf32>
    %c0_122 = arith.constant 0 : index
    %c5_123 = arith.constant 5 : index
    %c0_124 = arith.constant 0 : index
    %c0_125 = arith.constant 0 : index
    %171 = vector.load %arg5[%c0_122, %c5_123, %c0_124, %c0_125] : memref<1x8x2x128xf32, #tpu.memory_space<vmem>>, vector<1x1x2x128xf32>
    %172 = vector.shape_cast %171 : vector<1x1x2x128xf32> to vector<2x128xf32>
    %173 = vector.shape_cast %170 : vector<2x128xf32> to vector<1x1x2x128xf32>
    tpu.vector_store %arg5[%c0_122, %c5_123, %c0_124, %c0_125], %173 {strides = array<i32>} : memref<1x8x2x128xf32, #tpu.memory_space<vmem>>, vector<1x1x2x128xf32>,
    %c0_126 = arith.constant 0 : index
    %c0_127 = arith.constant 0 : index
    %c0_128 = arith.constant 0 : index
    %c0_129 = arith.constant 0 : index
    %174 = vector.load %arg4[%c0_126, %c0_127, %c0_128, %c0_129] : memref<1x4x2x128xf32, #tpu.memory_space<vmem>>, vector<1x1x2x128xf32>
    %175 = vector.shape_cast %174 : vector<1x1x2x128xf32> to vector<2x128xf32>
    %c6 = arith.constant 6 : index
    %176 = memref.load %arg2[%c6] : memref<32xf32, #tpu.memory_space<smem>>
    %177 = vector.broadcast %176 : f32 to vector<2x128xf32>
    %178 = arith.mulf %175, %177 : vector<2x128xf32>
    %c6_130 = arith.constant 6 : index
    %179 = memref.load %arg3[%c6_130] : memref<8xf32, #tpu.memory_space<smem>>
    %180 = vector.broadcast %179 : f32 to vector<2x128xf32>
    %181 = arith.addf %178, %180 : vector<2x128xf32>
    %c0_131 = arith.constant 0 : index
    %c1_132 = arith.constant 1 : index
    %c0_133 = arith.constant 0 : index
    %c0_134 = arith.constant 0 : index
    %182 = vector.load %arg4[%c0_131, %c1_132, %c0_133, %c0_134] : memref<1x4x2x128xf32, #tpu.memory_space<vmem>>, vector<1x1x2x128xf32>
    %183 = vector.shape_cast %182 : vector<1x1x2x128xf32> to vector<2x128xf32>
    %c14 = arith.constant 14 : index
    %184 = memref.load %arg2[%c14] : memref<32xf32, #tpu.memory_space<smem>>
    %185 = vector.broadcast %184 : f32 to vector<2x128xf32>
    %186 = arith.mulf %183, %185 : vector<2x128xf32>
    %187 = arith.addf %181, %186 : vector<2x128xf32>
    %c0_135 = arith.constant 0 : index
    %c2_136 = arith.constant 2 : index
    %c0_137 = arith.constant 0 : index
    %c0_138 = arith.constant 0 : index
    %188 = vector.load %arg4[%c0_135, %c2_136, %c0_137, %c0_138] : memref<1x4x2x128xf32, #tpu.memory_space<vmem>>, vector<1x1x2x128xf32>
    %189 = vector.shape_cast %188 : vector<1x1x2x128xf32> to vector<2x128xf32>
    %c22 = arith.constant 22 : index
    %190 = memref.load %arg2[%c22] : memref<32xf32, #tpu.memory_space<smem>>
    %191 = vector.broadcast %190 : f32 to vector<2x128xf32>
    %192 = arith.mulf %189, %191 : vector<2x128xf32>
    %193 = arith.addf %187, %192 : vector<2x128xf32>
    %c0_139 = arith.constant 0 : index
    %c3_140 = arith.constant 3 : index
    %c0_141 = arith.constant 0 : index
    %c0_142 = arith.constant 0 : index
    %194 = vector.load %arg4[%c0_139, %c3_140, %c0_141, %c0_142] : memref<1x4x2x128xf32, #tpu.memory_space<vmem>>, vector<1x1x2x128xf32>
    %195 = vector.shape_cast %194 : vector<1x1x2x128xf32> to vector<2x128xf32>
    %c30 = arith.constant 30 : index
    %196 = memref.load %arg2[%c30] : memref<32xf32, #tpu.memory_space<smem>>
    %197 = vector.broadcast %196 : f32 to vector<2x128xf32>
    %198 = arith.mulf %195, %197 : vector<2x128xf32>
    %199 = arith.addf %193, %198 : vector<2x128xf32>
    %c0_143 = arith.constant 0 : index
    %c6_144 = arith.constant 6 : index
    %c0_145 = arith.constant 0 : index
    %c0_146 = arith.constant 0 : index
    %200 = vector.load %arg5[%c0_143, %c6_144, %c0_145, %c0_146] : memref<1x8x2x128xf32, #tpu.memory_space<vmem>>, vector<1x1x2x128xf32>
    %201 = vector.shape_cast %200 : vector<1x1x2x128xf32> to vector<2x128xf32>
    %202 = vector.shape_cast %199 : vector<2x128xf32> to vector<1x1x2x128xf32>
    tpu.vector_store %arg5[%c0_143, %c6_144, %c0_145, %c0_146], %202 {strides = array<i32>} : memref<1x8x2x128xf32, #tpu.memory_space<vmem>>, vector<1x1x2x128xf32>,
    %c0_147 = arith.constant 0 : index
    %c0_148 = arith.constant 0 : index
    %c0_149 = arith.constant 0 : index
    %c0_150 = arith.constant 0 : index
    %203 = vector.load %arg4[%c0_147, %c0_148, %c0_149, %c0_150] : memref<1x4x2x128xf32, #tpu.memory_space<vmem>>, vector<1x1x2x128xf32>
    %204 = vector.shape_cast %203 : vector<1x1x2x128xf32> to vector<2x128xf32>
    %c7 = arith.constant 7 : index
    %205 = memref.load %arg2[%c7] : memref<32xf32, #tpu.memory_space<smem>>
    %206 = vector.broadcast %205 : f32 to vector<2x128xf32>
    %207 = arith.mulf %204, %206 : vector<2x128xf32>
    %c7_151 = arith.constant 7 : index
    %208 = memref.load %arg3[%c7_151] : memref<8xf32, #tpu.memory_space<smem>>
    %209 = vector.broadcast %208 : f32 to vector<2x128xf32>
    %210 = arith.addf %207, %209 : vector<2x128xf32>
    %c0_152 = arith.constant 0 : index
    %c1_153 = arith.constant 1 : index
    %c0_154 = arith.constant 0 : index
    %c0_155 = arith.constant 0 : index
    %211 = vector.load %arg4[%c0_152, %c1_153, %c0_154, %c0_155] : memref<1x4x2x128xf32, #tpu.memory_space<vmem>>, vector<1x1x2x128xf32>
    %212 = vector.shape_cast %211 : vector<1x1x2x128xf32> to vector<2x128xf32>
    %c15 = arith.constant 15 : index
    %213 = memref.load %arg2[%c15] : memref<32xf32, #tpu.memory_space<smem>>
    %214 = vector.broadcast %213 : f32 to vector<2x128xf32>
    %215 = arith.mulf %212, %214 : vector<2x128xf32>
    %216 = arith.addf %210, %215 : vector<2x128xf32>
    %c0_156 = arith.constant 0 : index
    %c2_157 = arith.constant 2 : index
    %c0_158 = arith.constant 0 : index
    %c0_159 = arith.constant 0 : index
    %217 = vector.load %arg4[%c0_156, %c2_157, %c0_158, %c0_159] : memref<1x4x2x128xf32, #tpu.memory_space<vmem>>, vector<1x1x2x128xf32>
    %218 = vector.shape_cast %217 : vector<1x1x2x128xf32> to vector<2x128xf32>
    %c23 = arith.constant 23 : index
    %219 = memref.load %arg2[%c23] : memref<32xf32, #tpu.memory_space<smem>>
    %220 = vector.broadcast %219 : f32 to vector<2x128xf32>
    %221 = arith.mulf %218, %220 : vector<2x128xf32>
    %222 = arith.addf %216, %221 : vector<2x128xf32>
    %c0_160 = arith.constant 0 : index
    %c3_161 = arith.constant 3 : index
    %c0_162 = arith.constant 0 : index
    %c0_163 = arith.constant 0 : index
    %223 = vector.load %arg4[%c0_160, %c3_161, %c0_162, %c0_163] : memref<1x4x2x128xf32, #tpu.memory_space<vmem>>, vector<1x1x2x128xf32>
    %224 = vector.shape_cast %223 : vector<1x1x2x128xf32> to vector<2x128xf32>
    %c31 = arith.constant 31 : index
    %225 = memref.load %arg2[%c31] : memref<32xf32, #tpu.memory_space<smem>>
    %226 = vector.broadcast %225 : f32 to vector<2x128xf32>
    %227 = arith.mulf %224, %226 : vector<2x128xf32>
    %228 = arith.addf %222, %227 : vector<2x128xf32>
    %c0_164 = arith.constant 0 : index
    %c7_165 = arith.constant 7 : index
    %c0_166 = arith.constant 0 : index
    %c0_167 = arith.constant 0 : index
    %229 = vector.load %arg5[%c0_164, %c7_165, %c0_166, %c0_167] : memref<1x8x2x128xf32, #tpu.memory_space<vmem>>, vector<1x1x2x128xf32>
    %230 = vector.shape_cast %229 : vector<1x1x2x128xf32> to vector<2x128xf32>
    %231 = vector.shape_cast %228 : vector<2x128xf32> to vector<1x1x2x128xf32>
    tpu.vector_store %arg5[%c0_164, %c7_165, %c0_166, %c0_167], %231 {strides = array<i32>} : memref<1x8x2x128xf32, #tpu.memory_space<vmem>>, vector<1x1x2x128xf32>,
    return
  }
  func.func @transform_0(%arg0: i32, %arg1: i32) -> i32 {
    %c0_i32 = arith.constant 0 : i32
    %c0_i32_0 = arith.constant 0 : i32
    return %c0_i32 : i32
  }
  func.func @transform_1(%arg0: i32, %arg1: i32) -> i32 {
    %c0_i32 = arith.constant 0 : i32
    %c0_i32_0 = arith.constant 0 : i32
    return %c0_i32 : i32
  }
  func.func @transform_2(%arg0: i32, %arg1: i32) -> (i32, i32, i32, i32) {
    %c0_i32 = arith.constant 0 : i32
    %c0_i32_0 = arith.constant 0 : i32
    %c0_i32_1 = arith.constant 0 : i32
    return %arg0, %c0_i32, %arg1, %c0_i32_0 : i32, i32, i32, i32
  }
  func.func @transform_3(%arg0: i32, %arg1: i32) -> (i32, i32, i32, i32) {
    %c0_i32 = arith.constant 0 : i32
    %c0_i32_0 = arith.constant 0 : i32
    %c0_i32_1 = arith.constant 0 : i32
    return %arg0, %c0_i32, %arg1, %c0_i32_0 : i32, i32, i32, i32
  }
}

</mosaic_0001>

<llo_original>
// kernel: _forward_impl.1
$region0: #{_forward_impl.1}
  #allocation0 [shape = 'u32[]', space=smem, size = 0x4, offset = 0x4, fixed_abs, tag = 'smem constant byte address 0x4 - core index']
  #allocation1 [shape = 'u32[72,128]{1,0:T(1,128)}', space=vmem, size = 0x9000, scoped, tag = 'internal scratch']
  %s0 = inlined_call_operand.vmem [shape: f32[32], index: 0, kind: input, shape index: {}]
  %s1 = inlined_call_operand.vmem [shape: f32[8], index: 1, kind: input, shape index: {}]
  %s2 = inlined_call_operand.vmem [shape: f32[2,4,2,128], index: 2, kind: input, shape index: {}]
  %s3 = inlined_call_operand.vmem [shape: f32[2,8,2,128], index: 3, kind: output, shape index: {}]
  %s4 = sld [smem:[#allocation0]]
  $region53: #{_forward_impl.1} parent=0
    _
  %s6 = ssub.s32 1, %s4
  %s7 = scalar_select 0, %s6, %s4
  $region1: #{_forward_impl.1} parent=0
    #allocation2 [shape = 'u8[512]{0}', space=smem, size = 0x200, scoped, tag = 'input window, operand 0, single buffered']
    #allocation3 [shape = 's32[2]{0}', space=sflag, size = 0x8, scoped, tag = 'scoped memory for _forward_impl.1']
    #allocation4 [shape = 'u8[512]{0}', space=smem, size = 0x200, scoped, tag = 'input window, operand 1, single buffered']
    #allocation5 [shape = 's32[1]{0}', space=sflag, size = 0x4, scoped, tag = 'scoped memory for _forward_impl.1']
    %8 = vsyncpa [#allocation3], 0
    %9 = vsyncpa [#allocation5], 0
    loop: start=0, step=1, limit=4
    $region2: #{_forward_impl.1} parent=1 // loop_pre_header
      _
    $region3: #{_forward_impl.1} parent=1 // loop_header
      %s11 = sphi 0, %s15
      %p12 = scmp.ge.s32.totalorder %s11, 4
      %s18 = sphi 0, %s30
      %s19 = sphi 0, %s26
      %s20 = sphi 0, %s18
      %s21 = sphi 0, %s19
      %s22 = sphi 0, %s20
      %s23 = sphi 0, %s21
      %s31 = sphi 0, %s31
      %s33 = sphi 0, %s31
      %s34 = sphi 0, %s33
      %s48 = sphi 0, %s34
      %s52 = sphi 0, %s52
      %s54 = sphi 0, %s52
      %s55 = sphi 0, %s54
      %s69 = sphi 0, %s55
      %s77 = sphi 0, %s79
      %s80 = sphi 0, %s77
      %s81 = sphi 0, %s80
      %s97 = sphi 0, %s81
      %s105 = sphi 0, %s107
      %s108 = sphi 0, %s105
      %s109 = sphi 0, %s108
      %s125 = sphi 0, %s109
    $region4: #{_forward_impl.1} parent=1 // loop_header_branch
      %14 = sbr.rel (%p12) target = $region8
    $region5: #{_forward_impl.1} parent=1 // loop_body
      %s16 = ssub.s32 %s11, 1
      %s17 = ssub.s32 %s11, 2
      %s24 = sadd.s32 1, %s19
      %p25 = scmp.ge.s32.totalorder %s24, 1
      %s26 = scalar_select %p25, 0, %s24
      %s27 = sadd.s32 1, %s18
      %s28 = scalar_select %p25, %s27, %s18
      %p29 = scmp.ge.s32.totalorder %s28, 2
      %s30 = scalar_select %p29, 0, %s28
      %s32 = sadd.s32 %s31, 1
      %p35 = scmp.eq.s32.totalorder %s11, 1
      %p36 = scmp.ne.s32.totalorder %s31, %s33
      %p37 = scmp.eq.s32.totalorder %s11, 0
      %p38 = por %p36, %p37
      %p39 = scmp.ne.s32.totalorder %s31, %s33
      %p40 = scmp.eq.s32.totalorder %s16, 1
      %p41 = por %p39, %p40
      %p42 = scmp.ne.s32.totalorder %s33, %s34
      %p43 = scmp.eq.s32.totalorder %s16, 0
      %p44 = por %p42, %p43
      %p45 = scmp.ne.s32.totalorder %s33, %s34
      %p46 = scmp.eq.s32.totalorder %s17, 1
      %p47 = por %p45, %p46
      %p49 = scmp.ne.s32.totalorder %s34, %s48
      %p50 = scmp.eq.s32.totalorder %s17, 0
      %p51 = por %p49, %p50
      %s53 = sadd.s32 %s52, 1
      %p56 = scmp.eq.s32.totalorder %s11, 1
      %p57 = scmp.ne.s32.totalorder %s52, %s54
      %p58 = scmp.eq.s32.totalorder %s11, 0
      %p59 = por %p57, %p58
      %p60 = scmp.ne.s32.totalorder %s52, %s54
      %p61 = scmp.eq.s32.totalorder %s16, 1
      %p62 = por %p60, %p61
      %p63 = scmp.ne.s32.totalorder %s54, %s55
      %p64 = scmp.eq.s32.totalorder %s16, 0
      %p65 = por %p63, %p64
      %p66 = scmp.ne.s32.totalorder %s54, %s55
      %p67 = scmp.eq.s32.totalorder %s17, 1
      %p68 = por %p66, %p67
      %p70 = scmp.ne.s32.totalorder %s55, %s69
      %p71 = scmp.eq.s32.totalorder %s17, 0
      %p72 = por %p70, %p71
      %s73 = ssub.s32 %s18, %s30
      %s74 = ssub.s32 %s19, %s26
      %s75 = sor.u32 %s73, %s74
      %p76 = scmp.eq.s32.totalorder %s75, 0
      %s78 = sadd.s32 %s77, 1
      %s79 = scalar_select %p76, %s77, %s78
      %p82 = pneg %p76
      %p83 = scmp.eq.s32.totalorder %s11, 1
      %p84 = por %p82, %p83
      %p85 = scmp.ne.s32.totalorder %s77, %s80
      %p86 = scmp.eq.s32.totalorder %s11, 0
      %p87 = por %p85, %p86
      %p88 = scmp.ne.s32.totalorder %s77, %s80
      %p89 = scmp.eq.s32.totalorder %s16, 1
      %p90 = por %p88, %p89
      %p91 = scmp.ne.s32.totalorder %s80, %s81
      %p92 = scmp.eq.s32.totalorder %s16, 0
      %p93 = por %p91, %p92
      %p94 = scmp.ne.s32.totalorder %s80, %s81
      %p95 = scmp.eq.s32.totalorder %s17, 1
      %p96 = por %p94, %p95
      %p98 = scmp.ne.s32.totalorder %s81, %s97
      %p99 = scmp.eq.s32.totalorder %s17, 0
      %p100 = por %p98, %p99
      %s101 = ssub.s32 %s18, %s30
      %s102 = ssub.s32 %s19, %s26
      %s103 = sor.u32 %s101, %s102
      %p104 = scmp.eq.s32.totalorder %s103, 0
      %s106 = sadd.s32 %s105, 1
      %s107 = scalar_select %p104, %s105, %s106
      %p110 = pneg %p104
      %p111 = scmp.eq.s32.totalorder %s11, 1
      %p112 = por %p110, %p111
      %p113 = scmp.ne.s32.totalorder %s105, %s108
      %p114 = scmp.eq.s32.totalorder %s11, 0
      %p115 = por %p113, %p114
      %p116 = scmp.ne.s32.totalorder %s105, %s108
      %p117 = scmp.eq.s32.totalorder %s16, 1
      %p118 = por %p116, %p117
      %p119 = scmp.ne.s32.totalorder %s108, %s109
      %p120 = scmp.eq.s32.totalorder %s16, 0
      %p121 = por %p119, %p120
      %p122 = scmp.ne.s32.totalorder %s108, %s109
      %p123 = scmp.eq.s32.totalorder %s17, 1
      %p124 = por %p122, %p123
      %p126 = scmp.ne.s32.totalorder %s109, %s125
      %p127 = scmp.eq.s32.totalorder %s17, 0
      %p128 = por %p126, %p127
      %p129 = scmp.le.s32.totalorder 1, %s11
      %p130 = scmp.lt.s32.totalorder %s11, 3
      %p131 = pnand %p129, %p130
      %p132 = pneg %p131
      // Predicated region
      $region9: #{_forward_impl.1} parent=5 // pred_check
        _
      $region10: #{_forward_impl.1} parent=5 // pred_check_branch
        %134 = sbr.rel (%p131) target = $region12
      $region11: #{_forward_impl.1} parent=5 // pred_region
        %s135 = ssub.s32 %s11, 1
        // Predicated region
        $region13: #{_forward_impl.1} parent=11 // pred_check
          %p136 = pneg %p44
        $region14: #{_forward_impl.1} parent=11 // pred_check_branch
          %138 = sbr.rel (%p136) target = $region16
        $region15: #{_forward_impl.1} parent=11 // pred_region
          %140 = vsyncadd [#allocation3], 0
          %s142 = sshll.u32 %s0, 4
          %s143 = int_to_ptr.vmem [resolvable:$true] %s142
          %145 = dma.vmem_to_smem %s143, 16, [#allocation2], [#allocation3]
        $region16: #{_forward_impl.1} parent=11 // pred_fallthru
          _
        // Predicated region
        $region17: #{_forward_impl.1} parent=11 // pred_check
          %p146 = pneg %p65
        $region18: #{_forward_impl.1} parent=11 // pred_check_branch
          %148 = sbr.rel (%p146) target = $region20
        $region19: #{_forward_impl.1} parent=11 // pred_region
          %150 = vsyncadd [#allocation5], 0
          %s152 = sshll.u32 %s1, 4
          %s153 = int_to_ptr.vmem [resolvable:$true] %s152
          %155 = dma.vmem_to_smem %s153, 16, [#allocation4], [#allocation5]
        $region20: #{_forward_impl.1} parent=11 // pred_fallthru
          _
      $region12: #{_forward_impl.1} parent=5 // pred_fallthru
        _
      %p156 = scmp.lt.s32.totalorder %s11, 2
      // Predicated region
      $region21: #{_forward_impl.1} parent=5 // pred_check
        %p157 = pneg %p156
      $region22: #{_forward_impl.1} parent=5 // pred_check_branch
        %159 = sbr.rel (%p157) target = $region24
      $region23: #{_forward_impl.1} parent=5 // pred_region
        // Predicated region
        $region25: #{_forward_impl.1} parent=23 // pred_check
          %p160 = pneg %p87
        $region26: #{_forward_impl.1} parent=23 // pred_check_branch
          %162 = sbr.rel (%p160) target = $region28
        $region27: #{_forward_impl.1} parent=23 // pred_region
          %p163 = scmp.lt.s32.totalorder %s18, 1
          %s164 = scalar_select %p163, %s18, 1
          %p165 = scmp.lt.s32.totalorder %s19, 0
          %s166 = scalar_select %p165, %s19, 0
          %s167 = smul.addr %s164, 4
          %s168 = sadd.s32 %s166, %s167
          %s169 = smul.addr %s168, 2
          %s170 = scalar_lea.vmem %s2, %s169
        $region28: #{_forward_impl.1} parent=23 // pred_fallthru
          _
      $region24: #{_forward_impl.1} parent=5 // pred_fallthru
        _
      %p171 = scmp.le.s32.totalorder 1, %s11
      %p172 = scmp.lt.s32.totalorder %s11, 3
      %p173 = pnand %p171, %p172
      %p174 = pneg %p173
      // Predicated region
      $region29: #{_forward_impl.1} parent=5 // pred_check
        _
      $region30: #{_forward_impl.1} parent=5 // pred_check_branch
        %176 = sbr.rel (%p173) target = $region32
      $region31: #{_forward_impl.1} parent=5 // pred_region
        %s177 = ssub.s32 %s11, 1
        // Predicated region
        $region33: #{_forward_impl.1} parent=31 // pred_check
          %p178 = pneg %p44
        $region34: #{_forward_impl.1} parent=31 // pred_check_branch
          %180 = sbr.rel (%p178) target = $region36
        $region35: #{_forward_impl.1} parent=31 // pred_region
          %182 = dma.done [#allocation3], 16
        $region36: #{_forward_impl.1} parent=31 // pred_fallthru
          _
        // Predicated region
        $region37: #{_forward_impl.1} parent=31 // pred_check
          %p183 = pneg %p65
        $region38: #{_forward_impl.1} parent=31 // pred_check_branch
          %185 = sbr.rel (%p183) target = $region40
        $region39: #{_forward_impl.1} parent=31 // pred_region
          %187 = dma.done [#allocation5], 16
        $region40: #{_forward_impl.1} parent=31 // pred_fallthru
          _
        %188 = sfence
        %p189 = pneg %p44
        %p190 = pneg %p41
        %p191 = pneg %p65
        %p192 = pneg %p62
        %p193 = scmp.lt.s32.totalorder %s20, 1
        %s194 = scalar_select %p193, %s20, 1
        %p195 = scmp.lt.s32.totalorder %s21, 0
        %s196 = scalar_select %p195, %s21, 0
        %s197 = smul.addr %s194, 4
        %s198 = sadd.s32 %s196, %s197
        %s199 = smul.addr %s198, 2
        %s200 = scalar_lea.vmem %s2, %s199
        %p201 = pneg %p93
        %p202 = pneg %p90
        %p203 = pneg %p121
        %p204 = pneg %p118
        %p205 = scmp.lt.s32.totalorder %s20, 1
        %s206 = scalar_select %p205, %s20, 1
        %p207 = scmp.lt.s32.totalorder %s21, 0
        %s208 = scalar_select %p207, %s21, 0
        %s209 = smul.addr %s206, 8
        %s210 = sadd.s32 %s208, %s209
        %s211 = smul.addr %s210, 2
        %s212 = scalar_lea.vmem %s3, %s211
        %p213 = scmp.lt.s32.totalorder %s20, 1
        %s214 = scalar_select %p213, %s20, 1
        %p215 = scmp.lt.s32.totalorder %s21, 0
        %s216 = scalar_select %p215, %s21, 0
        %s217 = smul.addr %s214, 4
        %s218 = sadd.s32 %s216, %s217
        %s219 = smul.addr %s218, 2
        %s220 = scalar_lea.vmem %s2, %s219
        %p221 = scmp.lt.s32.totalorder %s20, 1
        %s222 = scalar_select %p221, %s20, 1
        %p223 = scmp.lt.s32.totalorder %s21, 0
        %s224 = scalar_select %p223, %s21, 0
        %s225 = smul.addr %s222, 8
        %s226 = sadd.s32 %s224, %s225
        %s227 = smul.addr %s226, 2
        %s228 = scalar_lea.vmem %s3, %s227
        %v229 = vld [vmem:[%s220] sm:$0x3]
        %s230 = sld [smem:[#allocation2]]
        %v231 = vstv %s230
        %v232 = vmul.f32 %v229, %v231
        %s233 = sld [smem:[#allocation4]]
        %v234 = vstv %s233
        %v235 = vadd.f32 %v232, %v234
        %s236 = scalar_lea.vmem %s220, 2
        %v237 = vld [vmem:[%s236] sm:$0x3]
        %s238 = sld [smem:[#allocation2 + $0x8]]
        %v239 = vstv %s238
        %v240 = vmul.f32 %v237, %v239
        %v241 = vadd.f32 %v235, %v240
        %s242 = scalar_lea.vmem %s220, 4
        %v243 = vld [vmem:[%s242] sm:$0x3]
        %s244 = sld [smem:[#allocation2 + $0x10]]
        %v245 = vstv %s244
        %v246 = vmul.f32 %v243, %v245
        %v247 = vadd.f32 %v241, %v246
        %s248 = scalar_lea.vmem %s220, 6
        %v249 = vld [vmem:[%s248] sm:$0x3]
        %s250 = sld [smem:[#allocation2 + $0x18]]
        %v251 = vstv %s250
        %v252 = vmul.f32 %v249, %v251
        %v253 = vadd.f32 %v247, %v252
        %254 = vst [vmem:[%s228] sm:$0x3] %v253
        %v255 = vld [vmem:[%s220] sm:$0x3]
        %s256 = sld [smem:[#allocation2 + $0x1]]
        %v257 = vstv %s256
        %v258 = vmul.f32 %v255, %v257
        %s259 = sld [smem:[#allocation4 + $0x1]]
        %v260 = vstv %s259
        %v261 = vadd.f32 %v258, %v260
        %v262 = vld [vmem:[%s236] sm:$0x3]
        %s263 = sld [smem:[#allocation2 + $0x9]]
        %v264 = vstv %s263
        %v265 = vmul.f32 %v262, %v264
        %v266 = vadd.f32 %v261, %v265
        %v267 = vld [vmem:[%s242] sm:$0x3]
        %s268 = sld [smem:[#allocation2 + $0x11]]
        %v269 = vstv %s268
        %v270 = vmul.f32 %v267, %v269
        %v271 = vadd.f32 %v266, %v270
        %v272 = vld [vmem:[%s248] sm:$0x3]
        %s273 = sld [smem:[#allocation2 + $0x19]]
        %v274 = vstv %s273
        %v275 = vmul.f32 %v272, %v274
        %v276 = vadd.f32 %v271, %v275
        %s277 = scalar_lea.vmem %s228, 2
        %278 = vst [vmem:[%s277] sm:$0x3] %v276
        %v279 = vld [vmem:[%s220] sm:$0x3]
        %s280 = sld [smem:[#allocation2 + $0x2]]
        %v281 = vstv %s280
        %v282 = vmul.f32 %v279, %v281
        %s283 = sld [smem:[#allocation4 + $0x2]]
        %v284 = vstv %s283
        %v285 = vadd.f32 %v282, %v284
        %v286 = vld [vmem:[%s236] sm:$0x3]
        %s287 = sld [smem:[#allocation2 + $0xa]]
        %v288 = vstv %s287
        %v289 = vmul.f32 %v286, %v288
        %v290 = vadd.f32 %v285, %v289
        %v291 = vld [vmem:[%s242] sm:$0x3]
        %s292 = sld [smem:[#allocation2 + $0x12]]
        %v293 = vstv %s292
        %v294 = vmul.f32 %v291, %v293
        %v295 = vadd.f32 %v290, %v294
        %v296 = vld [vmem:[%s248] sm:$0x3]
        %s297 = sld [smem:[#allocation2 + $0x1a]]
        %v298 = vstv %s297
        %v299 = vmul.f32 %v296, %v298
        %v300 = vadd.f32 %v295, %v299
        %s301 = scalar_lea.vmem %s228, 4
        %302 = vst [vmem:[%s301] sm:$0x3] %v300
        %v303 = vld [vmem:[%s220] sm:$0x3]
        %s304 = sld [smem:[#allocation2 + $0x3]]
        %v305 = vstv %s304
        %v306 = vmul.f32 %v303, %v305
        %s307 = sld [smem:[#allocation4 + $0x3]]
        %v308 = vstv %s307
        %v309 = vadd.f32 %v306, %v308
        %v310 = vld [vmem:[%s236] sm:$0x3]
        %s311 = sld [smem:[#allocation2 + $0xb]]
        %v312 = vstv %s311
        %v313 = vmul.f32 %v310, %v312
        %v314 = vadd.f32 %v309, %v313
        %v315 = vld [vmem:[%s242] sm:$0x3]
        %s316 = sld [smem:[#allocation2 + $0x13]]
        %v317 = vstv %s316
        %v318 = vmul.f32 %v315, %v317
        %v319 = vadd.f32 %v314, %v318
        %v320 = vld [vmem:[%s248] sm:$0x3]
        %s321 = sld [smem:[#allocation2 + $0x1b]]
        %v322 = vstv %s321
        %v323 = vmul.f32 %v320, %v322
        %v324 = vadd.f32 %v319, %v323
        %s325 = scalar_lea.vmem %s228, 6
        %326 = vst [vmem:[%s325] sm:$0x3] %v324
        %v327 = vld [vmem:[%s220] sm:$0x3]
        %s328 = sld [smem:[#allocation2 + $0x4]]
        %v329 = vstv %s328
        %v330 = vmul.f32 %v327, %v329
        %s331 = sld [smem:[#allocation4 + $0x4]]
        %v332 = vstv %s331
        %v333 = vadd.f32 %v330, %v332
        %v334 = vld [vmem:[%s236] sm:$0x3]
        %s335 = sld [smem:[#allocation2 + $0xc]]
        %v336 = vstv %s335
        %v337 = vmul.f32 %v334, %v336
        %v338 = vadd.f32 %v333, %v337
        %v339 = vld [vmem:[%s242] sm:$0x3]
        %s340 = sld [smem:[#allocation2 + $0x14]]
        %v341 = vstv %s340
        %v342 = vmul.f32 %v339, %v341
        %v343 = vadd.f32 %v338, %v342
        %v344 = vld [vmem:[%s248] sm:$0x3]
        %s345 = sld [smem:[#allocation2 + $0x1c]]
        %v346 = vstv %s345
        %v347 = vmul.f32 %v344, %v346
        %v348 = vadd.f32 %v343, %v347
        %s349 = scalar_lea.vmem %s228, 8
        %350 = vst [vmem:[%s349] sm:$0x3] %v348
        %v351 = vld [vmem:[%s220] sm:$0x3]
        %s352 = sld [smem:[#allocation2 + $0x5]]
        %v353 = vstv %s352
        %v354 = vmul.f32 %v351, %v353
        %s355 = sld [smem:[#allocation4 + $0x5]]
        %v356 = vstv %s355
        %v357 = vadd.f32 %v354, %v356
        %v358 = vld [vmem:[%s236] sm:$0x3]
        %s359 = sld [smem:[#allocation2 + $0xd]]
        %v360 = vstv %s359
        %v361 = vmul.f32 %v358, %v360
        %v362 = vadd.f32 %v357, %v361
        %v363 = vld [vmem:[%s242] sm:$0x3]
        %s364 = sld [smem:[#allocation2 + $0x15]]
        %v365 = vstv %s364
        %v366 = vmul.f32 %v363, %v365
        %v367 = vadd.f32 %v362, %v366
        %v368 = vld [vmem:[%s248] sm:$0x3]
        %s369 = sld [smem:[#allocation2 + $0x1d]]
        %v370 = vstv %s369
        %v371 = vmul.f32 %v368, %v370
        %v372 = vadd.f32 %v367, %v371
        %s373 = scalar_lea.vmem %s228, 10
        %374 = vst [vmem:[%s373] sm:$0x3] %v372
        %v375 = vld [vmem:[%s220] sm:$0x3]
        %s376 = sld [smem:[#allocation2 + $0x6]]
        %v377 = vstv %s376
        %v378 = vmul.f32 %v375, %v377
        %s379 = sld [smem:[#allocation4 + $0x6]]
        %v380 = vstv %s379
        %v381 = vadd.f32 %v378, %v380
        %v382 = vld [vmem:[%s236] sm:$0x3]
        %s383 = sld [smem:[#allocation2 + $0xe]]
        %v384 = vstv %s383
        %v385 = vmul.f32 %v382, %v384
        %v386 = vadd.f32 %v381, %v385
        %v387 = vld [vmem:[%s242] sm:$0x3]
        %s388 = sld [smem:[#allocation2 + $0x16]]
        %v389 = vstv %s388
        %v390 = vmul.f32 %v387, %v389
        %v391 = vadd.f32 %v386, %v390
        %v392 = vld [vmem:[%s248] sm:$0x3]
        %s393 = sld [smem:[#allocation2 + $0x1e]]
        %v394 = vstv %s393
        %v395 = vmul.f32 %v392, %v394
        %v396 = vadd.f32 %v391, %v395
        %s397 = scalar_lea.vmem %s228, 12
        %398 = vst [vmem:[%s397] sm:$0x3] %v396
        %v399 = vld [vmem:[%s220] sm:$0x3]
        %s400 = sld [smem:[#allocation2 + $0x7]]
        %v401 = vstv %s400
        %v402 = vmul.f32 %v399, %v401
        %s403 = sld [smem:[#allocation4 + $0x7]]
        %v404 = vstv %s403
        %v405 = vadd.f32 %v402, %v404
        %v406 = vld [vmem:[%s236] sm:$0x3]
        %s407 = sld [smem:[#allocation2 + $0xf]]
        %v408 = vstv %s407
        %v409 = vmul.f32 %v406, %v408
        %v410 = vadd.f32 %v405, %v409
        %v411 = vld [vmem:[%s242] sm:$0x3]
        %s412 = sld [smem:[#allocation2 + $0x17]]
        %v413 = vstv %s412
        %v414 = vmul.f32 %v411, %v413
        %v415 = vadd.f32 %v410, %v414
        %v416 = vld [vmem:[%s248] sm:$0x3]
        %s417 = sld [smem:[#allocation2 + $0x1f]]
        %v418 = vstv %s417
        %v419 = vmul.f32 %v416, %v418
        %v420 = vadd.f32 %v415, %v419
        %s421 = scalar_lea.vmem %s228, 14
        %422 = vst [vmem:[%s421] sm:$0x3] %v420
        %p423 = scmp.lt.s32.totalorder %s20, 1
        %s424 = scalar_select %p423, %s20, 1
        %p425 = scmp.lt.s32.totalorder %s21, 0
        %s426 = scalar_select %p425, %s21, 0
        %s427 = smul.addr %s424, 8
        %s428 = sadd.s32 %s426, %s427
        %s429 = smul.addr %s428, 2
        %s430 = scalar_lea.vmem %s3, %s429
        // Predicated region
        $region41: #{_forward_impl.1} parent=31 // pred_check
          %p431 = pneg %p118
        $region42: #{_forward_impl.1} parent=31 // pred_check_branch
          %433 = sbr.rel (%p431) target = $region44
        $region43: #{_forward_impl.1} parent=31 // pred_region
          _
        $region44: #{_forward_impl.1} parent=31 // pred_fallthru
          _
      $region32: #{_forward_impl.1} parent=5 // pred_fallthru
        _
      %p434 = scmp.le.s32.totalorder 2, %s11
      // Predicated region
      $region45: #{_forward_impl.1} parent=5 // pred_check
        %p435 = pneg %p434
      $region46: #{_forward_impl.1} parent=5 // pred_check_branch
        %437 = sbr.rel (%p435) target = $region48
      $region47: #{_forward_impl.1} parent=5 // pred_region
        %s438 = ssub.s32 %s11, 2
        // Predicated region
        $region49: #{_forward_impl.1} parent=47 // pred_check
          %p439 = pneg %p124
        $region50: #{_forward_impl.1} parent=47 // pred_check_branch
          %441 = sbr.rel (%p439) target = $region52
        $region51: #{_forward_impl.1} parent=47 // pred_region
          %p442 = scmp.lt.s32.totalorder %s22, 1
          %s443 = scalar_select %p442, %s22, 1
          %p444 = scmp.lt.s32.totalorder %s23, 0
          %s445 = scalar_select %p444, %s23, 0
          %s446 = smul.addr %s443, 8
          %s447 = sadd.s32 %s445, %s446
          %s448 = smul.addr %s447, 2
          %s449 = scalar_lea.vmem %s3, %s448
        $region52: #{_forward_impl.1} parent=47 // pred_fallthru
          _
      $region48: #{_forward_impl.1} parent=5 // pred_fallthru
        _
    $region6: #{_forward_impl.1} parent=1 // loop_footer
      %s15 = sadd.s32 1, %s11
    $region7: #{_forward_impl.1} parent=1 // loop_footer_branch
      %10 = sbr.rel target = $region3
    $region8: #{_forward_impl.1} parent=1 // loop_exit
      _
    %450 = vsyncpa [#allocation3], 1
    %s451 = scalar_lea.sflag [#allocation3], 1
    %452 = vsyncpa %s451, 1
    %453 = vsyncpa [#allocation5], 1

</llo_original>
